<compile_context>
chip_gen: v6e
topology: v6e:2x2x1
jax: 0.10.0
libtpu: 0.0.40
codegen_flags: <defaults>
</compile_context>

<pallas_src>
import functools

import jax
import jax.numpy as jnp
from jax.experimental import pallas as pl
from jax.experimental.pallas import tpu as pltpu

LANE = 128  # TPU lane width (last-dim vreg width for f32)


def _round_up(x, m):
    return ((x + m - 1) // m) * m


def _grownet_kernel(x_ref, w0_ref, b0_ref, w1_ref, b1_ref, w2_ref, b2_ref, o_ref):
    """One batch-tile of the fused 3-layer MLP.

    Matmuls run on the MXU (f32 accumulation via preferred_element_type);
    bias-add + ReLU epilogues stay in f32 on the VPU (cheap on all generations,
    required on v5e which has no bf16 VALU), casting back to the weight dtype
    only when feeding the next matmul.
    """
    h = jnp.dot(x_ref[...], w0_ref[...], preferred_element_type=jnp.float32)
    h = jnp.maximum(h + b0_ref[...], 0.0)

    h = jnp.dot(h.astype(w1_ref.dtype), w1_ref[...],
                preferred_element_type=jnp.float32)
    h = jnp.maximum(h + b1_ref[...], 0.0)

    h = jnp.dot(h.astype(w2_ref.dtype), w2_ref[...],
                preferred_element_type=jnp.float32)
    o_ref[...] = jnp.maximum(h + b2_ref[...], 0.0).astype(o_ref.dtype)


def prepare_params(params, compute_dtype=jnp.float32):
    """Zero-pad every (W, b) to lane-aligned (multiple-of-128) feature dims.

    Done ONCE at init (not per forward call). Padding is exact: padded input
    columns are multiplied by zero weight rows, padded hidden units come out as
    relu(0 + 0) = 0 and hit zero weight rows in the next layer, and padded output
    columns are sliced away after the kernel.
    """
    padded = []
    for w, b in params:
        fi, fo = w.shape
        fi_p, fo_p = _round_up(fi, LANE), _round_up(fo, LANE)
        wp = jnp.zeros((fi_p, fo_p), compute_dtype).at[:fi, :fo].set(
            w.astype(compute_dtype))
        bp = jnp.zeros((1, fo_p), jnp.float32).at[:, :fo].set(
            b.astype(jnp.float32))  # bias/epilogue always f32
        padded.append((wp, bp))
    return padded


@functools.partial(jax.jit, static_argnames=("out_features", "batch_tile"))
def grownet_submodel_forward(x, padded_params, *, out_features, batch_tile=256):
    """x: (B, inputSize) f32.  padded_params: output of prepare_params."""
    (w0, b0), (w1, b1), (w2, b2) = padded_params
    B, in_dim = x.shape
    in_p = w0.shape[0]
    out_p = w2.shape[1]

    # Pad batch to a multiple of the batch tile (>= 8 sublanes), input features to 128.
    tb = min(_round_up(B, 8), batch_tile)
    B_p = _round_up(B, tb)
    x_p = jnp.zeros((B_p, in_p), w0.dtype)
    x_p = x_p.at[:B, :in_dim].set(x.astype(w0.dtype))

    grid = (B_p // tb,)

    resident = lambda a: pl.BlockSpec(a.shape, lambda i: (0, 0))  # same block each step

    flops = 2 * B_p * (w0.shape[0] * w0.shape[1]
                       + w1.shape[0] * w1.shape[1]
                       + w2.shape[0] * w2.shape[1])
    bytes_accessed = sum(int(a.size * a.dtype.itemsize)
                         for a in (x_p, w0, b0, w1, b1, w2, b2)) \
        + B_p * out_p * 4

    out_padded = pl.pallas_call(
        _grownet_kernel,
        out_shape=jax.ShapeDtypeStruct((B_p, out_p), jnp.float32),
        grid=grid,
        in_specs=[
            pl.BlockSpec((tb, in_p), lambda i: (i, 0)),   # batch-tiled activations
            resident(w0), resident(b0),
            resident(w1), resident(b1),
            resident(w2), resident(b2),
        ],
        out_specs=pl.BlockSpec((tb, out_p), lambda i: (i, 0)),  # lane-dense (128) output
        compiler_params=pltpu.CompilerParams(
            dimension_semantics=("parallel",),            # shard batch tiles across TCs
        ),
        cost_estimate=pl.CostEstimate(
            flops=flops, transcendentals=0, bytes_accessed=bytes_accessed),
    )(x_p, w0, b0, w1, b1, w2, b2)

    return out_padded[:B, :out_features]


def init_params(key, input_size, output_size, layers=(64, 64)):
    """Deterministic init mimicking PyTorch nn.Linear (uniform +/- 1/sqrt(fan_in))."""
    dims = [input_size, *layers, output_size]
    params = []
    for i in range(len(dims) - 1):
        fan_in, fan_out = dims[i], dims[i + 1]
        key, kw, kb = jax.random.split(key, 3)
        bound = 1.0 / jnp.sqrt(fan_in)
        # stored as (in, out) so the kernel computes x @ W
        w = jax.random.uniform(kw, (fan_in, fan_out), jnp.float32, -bound, bound)
        b = jax.random.uniform(kb, (1, fan_out), jnp.float32, -bound, bound)
        params.append((w, b))
    return params


def reference_forward(x, params):
    h = x
    for w, b in params:
        h = jnp.maximum(h @ w + b, 0.0)
    return h


if __name__ == "__main__":
    key = jax.random.PRNGKey(0)
    B, INPUT_SIZE, OUTPUT_SIZE = 8, 32, 16
    LAYERS = [64, 64]

    key, kx = jax.random.split(key)
    x = jax.random.normal(kx, (B, INPUT_SIZE), jnp.float32)
    params = init_params(key, INPUT_SIZE, OUTPUT_SIZE, LAYERS)

    # Pad weights to 128-lane-aligned shapes once (f32 here; pass jnp.bfloat16 for
    # bf16 MXU inputs on v6e/v7x once the problem is scaled up).
    padded_params = prepare_params(params, compute_dtype=jnp.float32)

    out = grownet_submodel_forward(x, padded_params, out_features=OUTPUT_SIZE)
    out = jax.block_until_ready(out)

    ref = reference_forward(x, params)
    assert out.shape == (B, OUTPUT_SIZE)
    assert jnp.allclose(out, ref, atol=1e-5, rtol=1e-5), "mismatch vs JAX reference"

    print("KERNEL_OK")
</pallas_src>

<mosaic_0001>
module attributes {stable_mosaic.version = 11 : i64} {
  func.func @_grownet_kernel(%arg0: i32, %arg1: memref<8x128xf32, #tpu.memory_space<vmem>>, %arg2: memref<128x128xf32, #tpu.memory_space<vmem>>, %arg3: memref<1x128xf32, #tpu.memory_space<vmem>>, %arg4: memref<128x128xf32, #tpu.memory_space<vmem>>, %arg5: memref<1x128xf32, #tpu.memory_space<vmem>>, %arg6: memref<128x128xf32, #tpu.memory_space<vmem>>, %arg7: memref<1x128xf32, #tpu.memory_space<vmem>>, %arg8: memref<8x128xf32, #tpu.memory_space<vmem>>) attributes {dimension_semantics = [#tpu.dimension_semantics<parallel>], iteration_bounds = array<i64: 1>, scalar_prefetch = 0 : i64, scratch_operands = 0 : i64, tpu.core_type = #tpu.core_type<tc>, window_params = [{transform_indices = @transform_0, window_bounds = array<i64: 8, 128>}, {pipeline_mode = #tpu.pipeline_mode<synchronous>, transform_indices = @transform_1, window_bounds = array<i64: 128, 128>}, {pipeline_mode = #tpu.pipeline_mode<synchronous>, transform_indices = @transform_2, window_bounds = array<i64: 1, 128>}, {pipeline_mode = #tpu.pipeline_mode<synchronous>, transform_indices = @transform_3, window_bounds = array<i64: 128, 128>}, {pipeline_mode = #tpu.pipeline_mode<synchronous>, transform_indices = @transform_4, window_bounds = array<i64: 1, 128>}, {pipeline_mode = #tpu.pipeline_mode<synchronous>, transform_indices = @transform_5, window_bounds = array<i64: 128, 128>}, {pipeline_mode = #tpu.pipeline_mode<synchronous>, transform_indices = @transform_6, window_bounds = array<i64: 1, 128>}, {transform_indices = @transform_7, window_bounds = array<i64: 8, 128>}]} {
    %c0 = arith.constant 0 : index
    %c0_0 = arith.constant 0 : index
    %0 = vector.load %arg1[%c0, %c0_0] : memref<8x128xf32, #tpu.memory_space<vmem>>, vector<8x128xf32>
    %c0_1 = arith.constant 0 : index
    %c0_2 = arith.constant 0 : index
    %1 = vector.load %arg2[%c0_1, %c0_2] : memref<128x128xf32, #tpu.memory_space<vmem>>, vector<128x128xf32>
    %cst = arith.constant dense<0.000000e+00> : vector<8x128xf32>
    %2 = tpu.matmul %0, %1, %cst {dimension_numbers = #tpu.dot_dimension_numbers<[1], [0], [0], [1], [0, 0, 1, 1], [], []>} : vector<8x128xf32>, vector<128x128xf32>, vector<8x128xf32> -> vector<8x128xf32>
    %c0_3 = arith.constant 0 : index
    %c0_4 = arith.constant 0 : index
    %3 = vector.load %arg3[%c0_3, %c0_4] : memref<1x128xf32, #tpu.memory_space<vmem>>, vector<1x128xf32>
    %4 = vector.broadcast %3 : vector<1x128xf32> to vector<8x128xf32>
    %5 = arith.addf %2, %4 : vector<8x128xf32>
    %cst_5 = arith.constant 0.000000e+00 : f32
    %6 = vector.broadcast %cst_5 : f32 to vector<8x128xf32>
    %7 = arith.maximumf %5, %6 : vector<8x128xf32>
    %c0_6 = arith.constant 0 : index
    %c0_7 = arith.constant 0 : index
    %8 = vector.load %arg4[%c0_6, %c0_7] : memref<128x128xf32, #tpu.memory_space<vmem>>, vector<128x128xf32>
    %cst_8 = arith.constant dense<0.000000e+00> : vector<8x128xf32>
    %9 = tpu.matmul %7, %8, %cst_8 {dimension_numbers = #tpu.dot_dimension_numbers<[1], [0], [0], [1], [0, 0, 1, 1], [], []>} : vector<8x128xf32>, vector<128x128xf32>, vector<8x128xf32> -> vector<8x128xf32>
    %c0_9 = arith.constant 0 : index
    %c0_10 = arith.constant 0 : index
    %10 = vector.load %arg5[%c0_9, %c0_10] : memref<1x128xf32, #tpu.memory_space<vmem>>, vector<1x128xf32>
    %11 = vector.broadcast %10 : vector<1x128xf32> to vector<8x128xf32>
    %12 = arith.addf %9, %11 : vector<8x128xf32>
    %cst_11 = arith.constant 0.000000e+00 : f32
    %13 = vector.broadcast %cst_11 : f32 to vector<8x128xf32>
    %14 = arith.maximumf %12, %13 : vector<8x128xf32>
    %c0_12 = arith.constant 0 : index
    %c0_13 = arith.constant 0 : index
    %15 = vector.load %arg6[%c0_12, %c0_13] : memref<128x128xf32, #tpu.memory_space<vmem>>, vector<128x128xf32>
    %cst_14 = arith.constant dense<0.000000e+00> : vector<8x128xf32>
    %16 = tpu.matmul %14, %15, %cst_14 {dimension_numbers = #tpu.dot_dimension_numbers<[1], [0], [0], [1], [0, 0, 1, 1], [], []>} : vector<8x128xf32>, vector<128x128xf32>, vector<8x128xf32> -> vector<8x128xf32>
    %c0_15 = arith.constant 0 : index
    %c0_16 = arith.constant 0 : index
    %17 = vector.load %arg7[%c0_15, %c0_16] : memref<1x128xf32, #tpu.memory_space<vmem>>, vector<1x128xf32>
    %18 = vector.broadcast %17 : vector<1x128xf32> to vector<8x128xf32>
    %19 = arith.addf %16, %18 : vector<8x128xf32>
    %cst_17 = arith.constant 0.000000e+00 : f32
    %20 = vector.broadcast %cst_17 : f32 to vector<8x128xf32>
    %21 = arith.maximumf %19, %20 : vector<8x128xf32>
    %c0_18 = arith.constant 0 : index
    %c0_19 = arith.constant 0 : index
    %22 = vector.load %arg8[%c0_18, %c0_19] : memref<8x128xf32, #tpu.memory_space<vmem>>, vector<8x128xf32>
    tpu.vector_store %arg8[%c0_18, %c0_19], %21 {strides = array<i32>} : memref<8x128xf32, #tpu.memory_space<vmem>>, vector<8x128xf32>,
    return
  }
  func.func @transform_0(%arg0: i32) -> (i32, i32) {
    %c0_i32 = arith.constant 0 : i32
    %c0_i32_0 = arith.constant 0 : i32
    return %arg0, %c0_i32 : i32, i32
  }
  func.func @transform_1(%arg0: i32) -> (i32, i32) {
    %c0_i32 = arith.constant 0 : i32
    %c0_i32_0 = arith.constant 0 : i32
    %c0_i32_1 = arith.constant 0 : i32
    return %c0_i32, %c0_i32_0 : i32, i32
  }
  func.func @transform_2(%arg0: i32) -> (i32, i32) {
    %c0_i32 = arith.constant 0 : i32
    %c0_i32_0 = arith.constant 0 : i32
    %c0_i32_1 = arith.constant 0 : i32
    return %c0_i32, %c0_i32_0 : i32, i32
  }
  func.func @transform_3(%arg0: i32) -> (i32, i32) {
    %c0_i32 = arith.constant 0 : i32
    %c0_i32_0 = arith.constant 0 : i32
    %c0_i32_1 = arith.constant 0 : i32
    return %c0_i32, %c0_i32_0 : i32, i32
  }
  func.func @transform_4(%arg0: i32) -> (i32, i32) {
    %c0_i32 = arith.constant 0 : i32
    %c0_i32_0 = arith.constant 0 : i32
    %c0_i32_1 = arith.constant 0 : i32
    return %c0_i32, %c0_i32_0 : i32, i32
  }
  func.func @transform_5(%arg0: i32) -> (i32, i32) {
    %c0_i32 = arith.constant 0 : i32
    %c0_i32_0 = arith.constant 0 : i32
    %c0_i32_1 = arith.constant 0 : i32
    return %c0_i32, %c0_i32_0 : i32, i32
  }
  func.func @transform_6(%arg0: i32) -> (i32, i32) {
    %c0_i32 = arith.constant 0 : i32
    %c0_i32_0 = arith.constant 0 : i32
    %c0_i32_1 = arith.constant 0 : i32
    return %c0_i32, %c0_i32_0 : i32, i32
  }
  func.func @transform_7(%arg0: i32) -> (i32, i32) {
    %c0_i32 = arith.constant 0 : i32
    %c0_i32_0 = arith.constant 0 : i32
    return %arg0, %c0_i32 : i32, i32
  }
}

</mosaic_0001>

<llo_original>
// kernel: grownet_submodel_forward.1
$region0: #{grownet_submodel_forward.1}
  #allocation0 [shape = 'u32[]', space=smem, size = 0x4, offset = 0x4, fixed_abs, tag = 'smem constant byte address 0x4 - core index']
  #allocation1 [shape = 'u32[144,128]{1,0:T(1,128)}', space=vmem, size = 0x12000, scoped, tag = 'internal scratch']
  %s0 = inlined_call_operand.vmem [shape: f32[8,128], index: 0, kind: input, shape index: {}]
  %s1 = inlined_call_operand.hbm [shape: f32[128,128], index: 1, kind: input, shape index: {}]
  %s2 = inlined_call_operand.vmem [shape: f32[1,128], index: 2, kind: input, shape index: {}]
  %s3 = inlined_call_operand.hbm [shape: f32[128,128], index: 3, kind: input, shape index: {}]
  %s4 = inlined_call_operand.vmem [shape: f32[1,128], index: 4, kind: input, shape index: {}]
  %s5 = inlined_call_operand.hbm [shape: f32[128,128], index: 5, kind: input, shape index: {}]
  %s6 = inlined_call_operand.vmem [shape: f32[1,128], index: 6, kind: input, shape index: {}]
  %s7 = inlined_call_operand.hbm [shape: f32[8,128], index: 7, kind: output, shape index: {}]
  %s8 = sld [smem:[#allocation0]]
  $region50: #{grownet_submodel_forward.1} parent=0
    _
  %s10 = ssub.s32 1, %s8
  %s11 = scalar_select 0, %s10, %s8
  $region1: #{grownet_submodel_forward.1} parent=0
    #allocation2 [shape = 'u8[65536]{0}', space=vmem, size = 0x10000, scoped, tag = 'input window, operand 1, single buffered']
    #allocation3 [shape = 's32[1]{0}', space=sflag, size = 0x4, scoped, tag = 'scoped memory for grownet_submodel_forward.1']
    #allocation4 [shape = 's32[1]{0}', space=sflag, size = 0x4, scoped, tag = 'scoped memory for grownet_submodel_forward.1']
    #allocation5 [shape = 'u8[65536]{0}', space=vmem, size = 0x10000, scoped, tag = 'input window, operand 3, single buffered']
    #allocation6 [shape = 's32[1]{0}', space=sflag, size = 0x4, scoped, tag = 'scoped memory for grownet_submodel_forward.1']
    #allocation7 [shape = 'u8[65536]{0}', space=vmem, size = 0x10000, scoped, tag = 'input window, operand 5, single buffered']
    #allocation8 [shape = 'u8[4096]{0}', space=vmem, size = 0x1000, scoped, tag = 'output window, operand 0, single buffered']
    %12 = vsyncpa [#allocation3], 0
    %13 = vsyncpa [#allocation6], 0
    %14 = vsyncpa [#allocation4], 0
    // Predicated region
    $region2: #{grownet_submodel_forward.1} parent=1 // pred_check
      _
    $region3: #{grownet_submodel_forward.1} parent=1 // pred_check_branch
      %16 = sbr.rel (0) target = $region5
    $region4: #{grownet_submodel_forward.1} parent=1 // pred_region
      _
    $region5: #{grownet_submodel_forward.1} parent=1 // pred_fallthru
      _
    // Predicated region
    $region6: #{grownet_submodel_forward.1} parent=1 // pred_check
      _
    $region7: #{grownet_submodel_forward.1} parent=1 // pred_check_branch
      %18 = sbr.rel (0) target = $region9
    $region8: #{grownet_submodel_forward.1} parent=1 // pred_region
      %s20 = ssub.s32 2048, 2048
      %21 = vsyncadd [#allocation3], %s20
      %s22 = sshll.u32 [#allocation2], 4
      %s23 = int_to_ptr.vmem [resolvable:$true] %s22
      %28 = dma.hbm_to_vmem [thread:$0]  %s1, 2048, %s23, [#allocation3], 128, 128, 8
    $region9: #{grownet_submodel_forward.1} parent=1 // pred_fallthru
      _
    // Predicated region
    $region10: #{grownet_submodel_forward.1} parent=1 // pred_check
      _
    $region11: #{grownet_submodel_forward.1} parent=1 // pred_check_branch
      %30 = sbr.rel (0) target = $region13
    $region12: #{grownet_submodel_forward.1} parent=1 // pred_region
      _
    $region13: #{grownet_submodel_forward.1} parent=1 // pred_fallthru
      _
    // Predicated region
    $region14: #{grownet_submodel_forward.1} parent=1 // pred_check
      _
    $region15: #{grownet_submodel_forward.1} parent=1 // pred_check_branch
      %32 = sbr.rel (0) target = $region17
    $region16: #{grownet_submodel_forward.1} parent=1 // pred_region
      %s34 = ssub.s32 2048, 2048
      %35 = vsyncadd [#allocation6], %s34
      %s36 = sshll.u32 [#allocation5], 4
      %s37 = int_to_ptr.vmem [resolvable:$true] %s36
      %42 = dma.hbm_to_vmem [thread:$0]  %s3, 2048, %s37, [#allocation6], 128, 128, 8
    $region17: #{grownet_submodel_forward.1} parent=1 // pred_fallthru
      _
    // Predicated region
    $region18: #{grownet_submodel_forward.1} parent=1 // pred_check
      _
    $region19: #{grownet_submodel_forward.1} parent=1 // pred_check_branch
      %44 = sbr.rel (0) target = $region21
    $region20: #{grownet_submodel_forward.1} parent=1 // pred_region
      _
    $region21: #{grownet_submodel_forward.1} parent=1 // pred_fallthru
      _
    // Predicated region
    $region22: #{grownet_submodel_forward.1} parent=1 // pred_check
      _
    $region23: #{grownet_submodel_forward.1} parent=1 // pred_check_branch
      %46 = sbr.rel (0) target = $region25
    $region24: #{grownet_submodel_forward.1} parent=1 // pred_region
      %s48 = ssub.s32 2048, 2048
      %49 = vsyncadd [#allocation6], %s48
      %s50 = sshll.u32 [#allocation7], 4
      %s51 = int_to_ptr.vmem [resolvable:$true] %s50
      %56 = dma.hbm_to_vmem [thread:$0]  %s5, 2048, %s51, [#allocation6], 128, 128, 8
    $region25: #{grownet_submodel_forward.1} parent=1 // pred_fallthru
      _
    // Predicated region
    $region26: #{grownet_submodel_forward.1} parent=1 // pred_check
      _
    $region27: #{grownet_submodel_forward.1} parent=1 // pred_check_branch
      %58 = sbr.rel (0) target = $region29
    $region28: #{grownet_submodel_forward.1} parent=1 // pred_region
      _
    $region29: #{grownet_submodel_forward.1} parent=1 // pred_fallthru
      _
    // Predicated region
    $region30: #{grownet_submodel_forward.1} parent=1 // pred_check
      _
    $region31: #{grownet_submodel_forward.1} parent=1 // pred_check_branch
      %60 = sbr.rel (0) target = $region33
    $region32: #{grownet_submodel_forward.1} parent=1 // pred_region
      %61 = dma.done [#allocation3], 2048
    $region33: #{grownet_submodel_forward.1} parent=1 // pred_fallthru
      _
    // Predicated region
    $region34: #{grownet_submodel_forward.1} parent=1 // pred_check
      _
    $region35: #{grownet_submodel_forward.1} parent=1 // pred_check_branch
      %63 = sbr.rel (0) target = $region37
    $region36: #{grownet_submodel_forward.1} parent=1 // pred_region
      %64 = dma.done [#allocation6], 2048
    $region37: #{grownet_submodel_forward.1} parent=1 // pred_fallthru
      _
    // Predicated region
    $region38: #{grownet_submodel_forward.1} parent=1 // pred_check
      _
    $region39: #{grownet_submodel_forward.1} parent=1 // pred_check_branch
      %66 = sbr.rel (0) target = $region41
    $region40: #{grownet_submodel_forward.1} parent=1 // pred_region
      %67 = dma.done [#allocation6], 2048
    $region41: #{grownet_submodel_forward.1} parent=1 // pred_fallthru
      _
    %v68 = vld [vmem:[%s0] sm:$0xff]
    %v69 = vld [vmem:[#allocation2] sm:$0xff]
    %v70 = vld [vmem:[#allocation2 + $0x8] sm:$0xff]
    %v71 = vld [vmem:[#allocation2 + $0x10] sm:$0xff]
    %v72 = vld [vmem:[#allocation2 + $0x18] sm:$0xff]
    %v73 = vld [vmem:[#allocation2 + $0x20] sm:$0xff]
    %v74 = vld [vmem:[#allocation2 + $0x28] sm:$0xff]
    %v75 = vld [vmem:[#allocation2 + $0x30] sm:$0xff]
    %v76 = vld [vmem:[#allocation2 + $0x38] sm:$0xff]
    %v77 = vld [vmem:[#allocation2 + $0x40] sm:$0xff]
    %v78 = vld [vmem:[#allocation2 + $0x48] sm:$0xff]
    %v79 = vld [vmem:[#allocation2 + $0x50] sm:$0xff]
    %v80 = vld [vmem:[#allocation2 + $0x58] sm:$0xff]
    %v81 = vld [vmem:[#allocation2 + $0x60] sm:$0xff]
    %v82 = vld [vmem:[#allocation2 + $0x68] sm:$0xff]
    %v83 = vld [vmem:[#allocation2 + $0x70] sm:$0xff]
    %v84 = vld [vmem:[#allocation2 + $0x78] sm:$0xff]
    %v85 = vld [vmem:[%s2] sm:$0x1]
    %v87 = vlaneseq
    %v88 = vshrl.u32 %v87, 7
    %v89 = vsub.s32 0, %v88
    %v90 = vrot.slane %v85, %v89
    %92 = vmatprep.subr.mxu0 0.0
    %93 = vmatpush1.msra.mxu0 %v84
    %94 = vmatprep.subr.mxu0 0.0
    %95 = vmatpush1.msra.mxu0 %v83
    %96 = vmatprep.subr.mxu0 0.0
    %97 = vmatpush1.msra.mxu0 %v82
    %98 = vmatprep.subr.mxu0 0.0
    %99 = vmatpush1.msra.mxu0 %v81
    %100 = vmatprep.subr.mxu0 0.0
    %101 = vmatpush1.msra.mxu0 %v80
    %102 = vmatprep.subr.mxu0 0.0
    %103 = vmatpush1.msra.mxu0 %v79
    %104 = vmatprep.subr.mxu0 0.0
    %105 = vmatpush1.msra.mxu0 %v78
    %106 = vmatprep.subr.mxu0 0.0
    %107 = vmatpush1.msra.mxu0 %v77
    %108 = vmatprep.subr.mxu0 0.0
    %109 = vmatpush1.msra.mxu0 %v76
    %110 = vmatprep.subr.mxu0 0.0
    %111 = vmatpush1.msra.mxu0 %v75
    %112 = vmatprep.subr.mxu0 0.0
    %113 = vmatpush1.msra.mxu0 %v74
    %114 = vmatprep.subr.mxu0 0.0
    %115 = vmatpush1.msra.mxu0 %v73
    %116 = vmatprep.subr.mxu0 0.0
    %117 = vmatpush1.msra.mxu0 %v72
    %118 = vmatprep.subr.mxu0 0.0
    %119 = vmatpush1.msra.mxu0 %v71
    %120 = vmatprep.subr.mxu0 0.0
    %121 = vmatpush1.msra.mxu0 %v70
    %122 = vmatprep.subr.mxu0 0.0
    %123 = vmatpush1.msra.mxu0 %v69
    %124 = vmatprep.subr.mxu0 0.0
    %125 = vmatpush2.msra.mxu0 0.0
    %126 = vmatprep.subr.mxu0 0.0
    %127 = vmatpush2.msra.mxu0 0.0
    %128 = vmatprep.subr.mxu0 0.0
    %129 = vmatpush2.msra.mxu0 0.0
    %130 = vmatprep.subr.mxu0 0.0
    %131 = vmatpush2.msra.mxu0 0.0
    %132 = vmatprep.subr.mxu0 0.0
    %133 = vmatpush2.msra.mxu0 0.0
    %134 = vmatprep.subr.mxu0 0.0
    %135 = vmatpush2.msra.mxu0 0.0
    %136 = vmatprep.subr.mxu0 0.0
    %137 = vmatpush2.msra.mxu0 0.0
    %138 = vmatprep.subr.mxu0 0.0
    %139 = vmatpush2.msra.mxu0 0.0
    %140 = vmatprep.subr.mxu0 0.0
    %141 = vmatpush2.msra.mxu0 0.0
    %142 = vmatprep.subr.mxu0 0.0
    %143 = vmatpush2.msra.mxu0 0.0
    %144 = vmatprep.subr.mxu0 0.0
    %145 = vmatpush2.msra.mxu0 0.0
    %146 = vmatprep.subr.mxu0 0.0
    %147 = vmatpush2.msra.mxu0 0.0
    %148 = vmatprep.subr.mxu0 0.0
    %149 = vmatpush2.msra.mxu0 0.0
    %150 = vmatprep.subr.mxu0 0.0
    %151 = vmatpush2.msra.mxu0 0.0
    %152 = vmatprep.subr.mxu0 0.0
    %153 = vmatpush2.msra.mxu0 0.0
    %154 = vmatprep.subr.mxu0 0.0
    %155 = vmatpush2.msra.mxu0 0.0
    %156 = vmatprep.mubr.f32.mxu0 0.0
    %157 = vmatmul.mubr.f32.gmra.mxu0 %v68
    %v158 = vpop.f32.mrf.mxu0
    %v159 = vadd.f32 %v90, %v158
    %v160 = vpop.f32.mrf.mxu0
    %161 = vdwg.mxu0
    %v162 = vmax.f32 %v159, 0.0
    %v163 = vld [vmem:[#allocation5] sm:$0xff]
    %v164 = vld [vmem:[#allocation5 + $0x8] sm:$0xff]
    %v165 = vld [vmem:[#allocation5 + $0x10] sm:$0xff]
    %v166 = vld [vmem:[#allocation5 + $0x18] sm:$0xff]
    %v167 = vld [vmem:[#allocation5 + $0x20] sm:$0xff]
    %v168 = vld [vmem:[#allocation5 + $0x28] sm:$0xff]
    %v169 = vld [vmem:[#allocation5 + $0x30] sm:$0xff]
    %v170 = vld [vmem:[#allocation5 + $0x38] sm:$0xff]
    %v171 = vld [vmem:[#allocation5 + $0x40] sm:$0xff]
    %v172 = vld [vmem:[#allocation5 + $0x48] sm:$0xff]
    %v173 = vld [vmem:[#allocation5 + $0x50] sm:$0xff]
    %v174 = vld [vmem:[#allocation5 + $0x58] sm:$0xff]
    %v175 = vld [vmem:[#allocation5 + $0x60] sm:$0xff]
    %v176 = vld [vmem:[#allocation5 + $0x68] sm:$0xff]
    %v177 = vld [vmem:[#allocation5 + $0x70] sm:$0xff]
    %v178 = vld [vmem:[#allocation5 + $0x78] sm:$0xff]
    %v179 = vld [vmem:[%s4] sm:$0x1]
    %v181 = vlaneseq
    %v182 = vshrl.u32 %v181, 7
    %v183 = vsub.s32 0, %v182
    %v184 = vrot.slane %v179, %v183
    %186 = vmatprep.subr.mxu0 0.0
    %187 = vmatpush1.msra.mxu0 %v178
    %188 = vmatprep.subr.mxu0 0.0
    %189 = vmatpush1.msra.mxu0 %v177
    %190 = vmatprep.subr.mxu0 0.0
    %191 = vmatpush1.msra.mxu0 %v176
    %192 = vmatprep.subr.mxu0 0.0
    %193 = vmatpush1.msra.mxu0 %v175
    %194 = vmatprep.subr.mxu0 0.0
    %195 = vmatpush1.msra.mxu0 %v174
    %196 = vmatprep.subr.mxu0 0.0
    %197 = vmatpush1.msra.mxu0 %v173
    %198 = vmatprep.subr.mxu0 0.0
    %199 = vmatpush1.msra.mxu0 %v172
    %200 = vmatprep.subr.mxu0 0.0
    %201 = vmatpush1.msra.mxu0 %v171
    %202 = vmatprep.subr.mxu0 0.0
    %203 = vmatpush1.msra.mxu0 %v170
    %204 = vmatprep.subr.mxu0 0.0
    %205 = vmatpush1.msra.mxu0 %v169
    %206 = vmatprep.subr.mxu0 0.0
    %207 = vmatpush1.msra.mxu0 %v168
    %208 = vmatprep.subr.mxu0 0.0
    %209 = vmatpush1.msra.mxu0 %v167
    %210 = vmatprep.subr.mxu0 0.0
    %211 = vmatpush1.msra.mxu0 %v166
    %212 = vmatprep.subr.mxu0 0.0
    %213 = vmatpush1.msra.mxu0 %v165
    %214 = vmatprep.subr.mxu0 0.0
    %215 = vmatpush1.msra.mxu0 %v164
    %216 = vmatprep.subr.mxu0 0.0
    %217 = vmatpush1.msra.mxu0 %v163
    %218 = vmatprep.subr.mxu0 0.0
    %219 = vmatpush2.msra.mxu0 0.0
    %220 = vmatprep.subr.mxu0 0.0
    %221 = vmatpush2.msra.mxu0 0.0
    %222 = vmatprep.subr.mxu0 0.0
    %223 = vmatpush2.msra.mxu0 0.0
    %224 = vmatprep.subr.mxu0 0.0
    %225 = vmatpush2.msra.mxu0 0.0
    %226 = vmatprep.subr.mxu0 0.0
    %227 = vmatpush2.msra.mxu0 0.0
    %228 = vmatprep.subr.mxu0 0.0
    %229 = vmatpush2.msra.mxu0 0.0
    %230 = vmatprep.subr.mxu0 0.0
    %231 = vmatpush2.msra.mxu0 0.0
    %232 = vmatprep.subr.mxu0 0.0
    %233 = vmatpush2.msra.mxu0 0.0
    %234 = vmatprep.subr.mxu0 0.0
    %235 = vmatpush2.msra.mxu0 0.0
    %236 = vmatprep.subr.mxu0 0.0
    %237 = vmatpush2.msra.mxu0 0.0
    %238 = vmatprep.subr.mxu0 0.0
    %239 = vmatpush2.msra.mxu0 0.0
    %240 = vmatprep.subr.mxu0 0.0
    %241 = vmatpush2.msra.mxu0 0.0
    %242 = vmatprep.subr.mxu0 0.0
    %243 = vmatpush2.msra.mxu0 0.0
    %244 = vmatprep.subr.mxu0 0.0
    %245 = vmatpush2.msra.mxu0 0.0
    %246 = vmatprep.subr.mxu0 0.0
    %247 = vmatpush2.msra.mxu0 0.0
    %248 = vmatprep.subr.mxu0 0.0
    %249 = vmatpush2.msra.mxu0 0.0
    %250 = vmatprep.mubr.f32.mxu0 0.0
    %251 = vmatmul.mubr.f32.gmra.mxu0 %v162
    %v252 = vpop.f32.mrf.mxu0
    %v253 = vadd.f32 %v184, %v252
    %v254 = vpop.f32.mrf.mxu0
    %255 = vdwg.mxu0
    %v256 = vmax.f32 %v253, 0.0
    %v257 = vld [vmem:[#allocation7] sm:$0xff]
    %v258 = vld [vmem:[#allocation7 + $0x8] sm:$0xff]
    %v259 = vld [vmem:[#allocation7 + $0x10] sm:$0xff]
    %v260 = vld [vmem:[#allocation7 + $0x18] sm:$0xff]
    %v261 = vld [vmem:[#allocation7 + $0x20] sm:$0xff]
    %v262 = vld [vmem:[#allocation7 + $0x28] sm:$0xff]
    %v263 = vld [vmem:[#allocation7 + $0x30] sm:$0xff]
    %v264 = vld [vmem:[#allocation7 + $0x38] sm:$0xff]
    %v265 = vld [vmem:[#allocation7 + $0x40] sm:$0xff]
    %v266 = vld [vmem:[#allocation7 + $0x48] sm:$0xff]
    %v267 = vld [vmem:[#allocation7 + $0x50] sm:$0xff]
    %v268 = vld [vmem:[#allocation7 + $0x58] sm:$0xff]
    %v269 = vld [vmem:[#allocation7 + $0x60] sm:$0xff]
    %v270 = vld [vmem:[#allocation7 + $0x68] sm:$0xff]
    %v271 = vld [vmem:[#allocation7 + $0x70] sm:$0xff]
    %v272 = vld [vmem:[#allocation7 + $0x78] sm:$0xff]
    %v273 = vld [vmem:[%s6] sm:$0x1]
    %v275 = vlaneseq
    %v276 = vshrl.u32 %v275, 7
    %v277 = vsub.s32 0, %v276
    %v278 = vrot.slane %v273, %v277
    %280 = vmatprep.subr.mxu0 0.0
    %281 = vmatpush1.msra.mxu0 %v272
    %282 = vmatprep.subr.mxu0 0.0
    %283 = vmatpush1.msra.mxu0 %v271
    %284 = vmatprep.subr.mxu0 0.0
    %285 = vmatpush1.msra.mxu0 %v270
    %286 = vmatprep.subr.mxu0 0.0
    %287 = vmatpush1.msra.mxu0 %v269
    %288 = vmatprep.subr.mxu0 0.0
    %289 = vmatpush1.msra.mxu0 %v268
    %290 = vmatprep.subr.mxu0 0.0
    %291 = vmatpush1.msra.mxu0 %v267
    %292 = vmatprep.subr.mxu0 0.0
    %293 = vmatpush1.msra.mxu0 %v266
    %294 = vmatprep.subr.mxu0 0.0
    %295 = vmatpush1.msra.mxu0 %v265
    %296 = vmatprep.subr.mxu0 0.0
    %297 = vmatpush1.msra.mxu0 %v264
    %298 = vmatprep.subr.mxu0 0.0
    %299 = vmatpush1.msra.mxu0 %v263
    %300 = vmatprep.subr.mxu0 0.0
    %301 = vmatpush1.msra.mxu0 %v262
    %302 = vmatprep.subr.mxu0 0.0
    %303 = vmatpush1.msra.mxu0 %v261
    %304 = vmatprep.subr.mxu0 0.0
    %305 = vmatpush1.msra.mxu0 %v260
    %306 = vmatprep.subr.mxu0 0.0
    %307 = vmatpush1.msra.mxu0 %v259
    %308 = vmatprep.subr.mxu0 0.0
    %309 = vmatpush1.msra.mxu0 %v258
    %310 = vmatprep.subr.mxu0 0.0
    %311 = vmatpush1.msra.mxu0 %v257
    %312 = vmatprep.subr.mxu0 0.0
    %313 = vmatpush2.msra.mxu0 0.0
    %314 = vmatprep.subr.mxu0 0.0
    %315 = vmatpush2.msra.mxu0 0.0
    %316 = vmatprep.subr.mxu0 0.0
    %317 = vmatpush2.msra.mxu0 0.0
    %318 = vmatprep.subr.mxu0 0.0
    %319 = vmatpush2.msra.mxu0 0.0
    %320 = vmatprep.subr.mxu0 0.0
    %321 = vmatpush2.msra.mxu0 0.0
    %322 = vmatprep.subr.mxu0 0.0
    %323 = vmatpush2.msra.mxu0 0.0
    %324 = vmatprep.subr.mxu0 0.0
    %325 = vmatpush2.msra.mxu0 0.0
    %326 = vmatprep.subr.mxu0 0.0
    %327 = vmatpush2.msra.mxu0 0.0
    %328 = vmatprep.subr.mxu0 0.0
    %329 = vmatpush2.msra.mxu0 0.0
    %330 = vmatprep.subr.mxu0 0.0
    %331 = vmatpush2.msra.mxu0 0.0
    %332 = vmatprep.subr.mxu0 0.0
    %333 = vmatpush2.msra.mxu0 0.0
    %334 = vmatprep.subr.mxu0 0.0
    %335 = vmatpush2.msra.mxu0 0.0
    %336 = vmatprep.subr.mxu0 0.0
    %337 = vmatpush2.msra.mxu0 0.0
    %338 = vmatprep.subr.mxu0 0.0
    %339 = vmatpush2.msra.mxu0 0.0
    %340 = vmatprep.subr.mxu0 0.0
    %341 = vmatpush2.msra.mxu0 0.0
    %342 = vmatprep.subr.mxu0 0.0
    %343 = vmatpush2.msra.mxu0 0.0
    %344 = vmatprep.mubr.f32.mxu0 0.0
    %345 = vmatmul.mubr.f32.gmra.mxu0 %v256
    %v346 = vpop.f32.mrf.mxu0
    %v347 = vadd.f32 %v278, %v346
    %v348 = vpop.f32.mrf.mxu0
    %349 = vdwg.mxu0
    %v350 = vmax.f32 %v347, 0.0
    %351 = vst [vmem:[#allocation8] sm:$0xff] %v350
    // Predicated region
    $region42: #{grownet_submodel_forward.1} parent=1 // pred_check
      _
    $region43: #{grownet_submodel_forward.1} parent=1 // pred_check_branch
      %353 = sbr.rel (0) target = $region45
    $region44: #{grownet_submodel_forward.1} parent=1 // pred_region
      %s355 = ssub.s32 128, 128
      %356 = vsyncadd [#allocation4], %s355
      %s358 = sshll.u32 [#allocation8], 4
      %s359 = int_to_ptr.vmem [resolvable:$true] %s358
      %361 = dma.vmem_to_hbm [thread:$0]  %s359, 128, %s7, [#allocation4]
    $region45: #{grownet_submodel_forward.1} parent=1 // pred_fallthru
      _
    // Predicated region
    $region46: #{grownet_submodel_forward.1} parent=1 // pred_check
      _
    $region47: #{grownet_submodel_forward.1} parent=1 // pred_check_branch
      %363 = sbr.rel (0) target = $region49
    $region48: #{grownet_submodel_forward.1} parent=1 // pred_region
      %364 = dma.done [#allocation4], 128
    $region49: #{grownet_submodel_forward.1} parent=1 // pred_fallthru
      _
    %365 = vsyncpa [#allocation3], 1
    %366 = vsyncpa [#allocation6], 1
    %367 = vsyncpa [#allocation4], 1

</llo_original>
